<compile_context>
chip_gen: v7x
topology: tpu7x:2x2x1
jax: 0.10.0
libtpu: 0.0.40
codegen_flags: <defaults>
</compile_context>

<pallas_src>
import functools

import jax
import jax.numpy as jnp
from jax.experimental import pallas as pl
from jax.experimental.pallas import tpu as pltpu


def _cdiv(a, b):
    return -(-a // b)


def _round_up(a, m):
    return _cdiv(a, m) * m


def _focal_loss_kernel(pred_ref, tgt_ref, out_ref, acc_ref, *,
                       gamma, alpha, rows, block_rows, blocks_per_part,
                       need_mask, approx_recip):
    p = pl.program_id(0)
    j = pl.program_id(1)

    @pl.when(j == 0)
    def _init():
        acc_ref[...] = jnp.zeros_like(acc_ref)

    x = pred_ref[...].astype(jnp.float32)
    t = tgt_ref[...].astype(jnp.float32)

    # One shared transcendental feeds both the sigmoid and the BCE log term.
    e = jnp.exp(-jnp.abs(x))                          # exp(-|x|)
    r = pl.reciprocal(1.0 + e, approx=approx_recip)   # 1/(1+exp(-|x|)) on EUP
    sig = jnp.where(x >= 0, 1.0, e) * r               # sigmoid(x)

    # pt = (1 - sig) * t + sig * (1 - t)
    pt = t + sig * (1.0 - 2.0 * t)

    g = float(gamma)
    if g == 2.0:                                      # default: pure VPU, no pow
        pt_pow = pt * pt
    elif g == 1.0:
        pt_pow = pt
    elif g == 0.0:
        pt_pow = jnp.ones_like(pt)
    elif g == int(g) and 0.0 < g <= 4.0:
        pt_pow = pt
        for _ in range(int(g) - 1):
            pt_pow = pt_pow * pt
    else:
        pt_pow = pt ** g

    # alpha * t + (1 - alpha) * (1 - t)
    focal_w = ((1.0 - alpha) + (2.0 * alpha - 1.0) * t) * pt_pow

    # binary_cross_entropy_with_logits, reduction='none' (stable form):
    #   max(x, 0) - x*t + log1p(exp(-|x|))
    bce = jnp.maximum(x, 0.0) - x * t + jnp.log1p(e)

    loss = bce * focal_w

    if need_mask:
        # Rows of this block that really exist.  For a clamped duplicate block
        # rem <= 0 so everything is masked (contributes exactly zero).
        blk = p * blocks_per_part + j
        rem = rows - blk * block_rows
        row_idx = jax.lax.broadcasted_iota(jnp.int32, loss.shape, 0)
        loss = jnp.where(row_idx < rem, loss, 0.0)

    # Collapse block_rows -> 8 sublanes with tile-aligned vreg adds, then do a
    # single tiny (8, L) accumulator RMW (keeps the vst slot free of
    # block-sized stores).
    s = loss[0:8, :]
    for rb in range(1, block_rows // 8):
        s = s + loss[rb * 8:(rb + 1) * 8, :]
    acc_ref[...] += s

    @pl.when(j == pl.num_programs(1) - 1)
    def _finish():
        out_ref[...] = acc_ref[...]


def sigmoid_focal_loss_pallas(pred, target, gamma=2.0, alpha=0.25,
                              loss_weight=1.0, reduction="mean",
                              lanes=512, max_block_rows=1024,
                              num_partitions=2, approx_recip=True):
    """Pallas equivalent of FocalLoss.forward (use_sigmoid=True, weight=None,
    avg_factor=None, reduction in {'mean', 'sum'})."""
    assert reduction in ("mean", "sum"), "only 'mean'/'sum' implemented here"

    total = int(pred.size)
    L = int(lanes)
    P = max(1, int(num_partitions))

    p_flat = pred.reshape(-1)
    t_flat = target.reshape(-1)

    # Lane-dense (rows, L) presentation.  Rows only have to reach the (8, L)
    # minimum tile; row raggedness beyond that is handled in-kernel by masking
    # partial edge blocks, so this pad is at most 8*L - 1 elements and is
    # skipped entirely (copy-free reshape) for aligned totals.
    rows = max(8, _cdiv(total, L))
    padded_total = rows * L
    pad = padded_total - total
    if pad:
        # pred=-1e9, target=0 -> sig=0, pt=0, focal_w=0, bce=0: exactly zero
        # loss contribution from sentinel elements.
        # TODO(synk): this pad still materializes one XLA copy when
        # total % lanes != 0; fully copy-free only for aligned totals.
        p_flat = jnp.pad(p_flat, (0, pad), constant_values=-1e9)
        t_flat = jnp.pad(t_flat, (0, pad), constant_values=0)
    p2d = p_flat.reshape(rows, L)
    t2d = t_flat.reshape(rows, L)

    block_rows = min(int(max_block_rows),
                     _round_up(_cdiv(rows, P), 8),
                     (rows // 8) * 8)
    block_rows = max(8, (block_rows // 8) * 8)
    nb = _cdiv(rows, block_rows)          # total row-blocks
    B = _cdiv(nb, P)                      # blocks per partition (grid axis 1)

    # Does any grid step touch rows past the end of the array (partial edge
    # block or duplicated/clamped block)?  Static -> mask & clamp compiled out
    # when the grid tiles the array exactly.
    need_mask = (P * B * block_rows) != rows

    def in_map(pi, ji):
        blk = pi * B + ji
        if need_mask:
            blk = jnp.minimum(blk, nb - 1)   # never DMA a fully-OOB block
        return (blk, 0)

    kernel = functools.partial(
        _focal_loss_kernel, gamma=float(gamma), alpha=float(alpha),
        rows=rows, block_rows=block_rows, blocks_per_part=B,
        need_mask=need_mask, approx_recip=bool(approx_recip))

    cost = pl.CostEstimate(
        flops=22 * padded_total,
        transcendentals=3 * padded_total,
        bytes_accessed=2 * padded_total * 4 + P * 8 * L * 4,
    )

    # 2 inputs x 2 pipeline buffers per block, plus headroom for spills of the
    # large elementwise intermediates; capped below v7x's 64 MiB/TC physical.
    vmem_limit = int(min(48 << 20, 4 * block_rows * L * 4 + (24 << 20)))

    partials = pl.pallas_call(
        kernel,
        out_shape=jax.ShapeDtypeStruct((P, 8, L), jnp.float32),
        grid_spec=pltpu.PrefetchScalarGridSpec(
            num_scalar_prefetch=0,
            grid=(P, B),
            in_specs=[
                pl.BlockSpec((block_rows, L), in_map),
                pl.BlockSpec((block_rows, L), in_map),
            ],
            out_specs=pl.BlockSpec((None, 8, L), lambda pi, ji: (pi, 0, 0)),
            scratch_shapes=[pltpu.VMEM((8, L), jnp.float32)],
        ),
        compiler_params=pltpu.CompilerParams(
            dimension_semantics=("parallel", "arbitrary"),
            vmem_limit_bytes=vmem_limit),
        cost_estimate=cost,
    )(p2d, t2d)

    loss_sum = jnp.sum(partials)          # tiny (P*8*L) cross-lane sum in XLA
    if reduction == "mean":
        loss = loss_sum / jnp.float32(total)
    else:  # 'sum'
        loss = loss_sum
    return jnp.float32(loss_weight) * loss


def _reference_focal_loss(pred, target, gamma=2.0, alpha=0.25,
                          loss_weight=1.0, reduction="mean"):
    x = pred.astype(jnp.float32)
    t = target.astype(jnp.float32)
    sig = jax.nn.sigmoid(x)
    pt = (1 - sig) * t + sig * (1 - t)
    fw = (alpha * t + (1 - alpha) * (1 - t)) * pt ** gamma
    bce = jnp.maximum(x, 0.0) - x * t + jnp.log1p(jnp.exp(-jnp.abs(x)))
    loss = bce * fw
    red = jnp.mean(loss) if reduction == "mean" else jnp.sum(loss)
    return loss_weight * red


if __name__ == "__main__":
    # FocalLoss(use_sigmoid=True, gamma=2.0, alpha=0.25,
    #           reduction='mean', loss_weight=1.0) — no learnable params.
    key = jax.random.PRNGKey(0)
    k_pred, k_tgt = jax.random.split(key)

    # (N, C) predictions and one-hot {0,1} targets.
    N, C = 128, 16
    pred = jax.random.normal(k_pred, (N, C), dtype=jnp.float32) * 2.0
    labels = jax.random.randint(k_tgt, (N,), 0, C)
    target = jax.nn.one_hot(labels, C, dtype=jnp.float32)

    loss = jax.block_until_ready(
        sigmoid_focal_loss_pallas(pred, target, gamma=2.0, alpha=0.25,
                                  loss_weight=1.0, reduction="mean"))
    ref = _reference_focal_loss(pred, target)
    assert jnp.allclose(loss, ref, rtol=1e-2, atol=1e-5), (loss, ref)

    # Ragged shape exercising the alignment pad + in-kernel mask path, 'sum'.
    N2, C2 = 37, 5
    pred2 = jax.random.normal(k_pred, (N2, C2), dtype=jnp.float32) * 3.0
    labels2 = jax.random.randint(k_tgt, (N2,), 0, C2)
    target2 = jax.nn.one_hot(labels2, C2, dtype=jnp.float32)
    loss2 = jax.block_until_ready(
        sigmoid_focal_loss_pallas(pred2, target2, reduction="sum"))
    ref2 = _reference_focal_loss(pred2, target2, reduction="sum")
    assert jnp.allclose(loss2, ref2, rtol=1e-2, atol=1e-3), (loss2, ref2)

    # Aligned shape exercising the copy-free, mask-free multi-block path.
    N3, C3 = 512, 64
    pred3 = jax.random.normal(k_pred, (N3, C3), dtype=jnp.float32)
    labels3 = jax.random.randint(k_tgt, (N3,), 0, C3)
    target3 = jax.nn.one_hot(labels3, C3, dtype=jnp.float32)
    loss3 = jax.block_until_ready(
        sigmoid_focal_loss_pallas(pred3, target3, reduction="mean"))
    ref3 = _reference_focal_loss(pred3, target3)
    assert jnp.allclose(loss3, ref3, rtol=1e-2, atol=1e-5), (loss3, ref3)

    print("KERNEL_OK")
</pallas_src>

<mosaic_0001>
module attributes {stable_mosaic.version = 11 : i64} {
  func.func @_focal_loss_kernel(%arg0: i32, %arg1: i32, %arg2: memref<8x512xf32, #tpu.memory_space<vmem>>, %arg3: memref<8x512xf32, #tpu.memory_space<vmem>>, %arg4: memref<1x8x512xf32, #tpu.memory_space<vmem>>, %arg5: memref<8x512xf32, #tpu.memory_space<vmem>>) attributes {dimension_semantics = [#tpu.dimension_semantics<parallel>, #tpu.dimension_semantics<arbitrary>], iteration_bounds = array<i64: 2, 1>, scalar_prefetch = 0 : i64, scratch_operands = 1 : i64, tpu.core_type = #tpu.core_type<tc>, window_params = [{transform_indices = @transform_0, window_bounds = array<i64: 8, 512>}, {transform_indices = @transform_1, window_bounds = array<i64: 8, 512>}, {transform_indices = @transform_2, window_bounds = array<i64: 1, 8, 512>}]} {
    %c0_i32 = arith.constant 0 : i32
    %0 = arith.cmpi eq, %arg1, %c0_i32 : i32
    %1 = arith.extui %0 : i1 to i32
    %c0_i32_0 = arith.constant 0 : i32
    %2 = arith.cmpi ne, %1, %c0_i32_0 : i32
    scf.if %2 {
      %cst_20 = arith.constant 0.000000e+00 : f32
      %51 = vector.broadcast %cst_20 : f32 to vector<8x512xf32>
      %c0_21 = arith.constant 0 : index
      %c0_22 = arith.constant 0 : index
      %52 = vector.load %arg5[%c0_21, %c0_22] : memref<8x512xf32, #tpu.memory_space<vmem>>, vector<8x512xf32>
      tpu.vector_store %arg5[%c0_21, %c0_22], %51 {strides = array<i32>} : memref<8x512xf32, #tpu.memory_space<vmem>>, vector<8x512xf32>,
    } else {
    }
    %c0 = arith.constant 0 : index
    %c0_1 = arith.constant 0 : index
    %3 = vector.load %arg2[%c0, %c0_1] : memref<8x512xf32, #tpu.memory_space<vmem>>, vector<8x512xf32>
    %c0_2 = arith.constant 0 : index
    %c0_3 = arith.constant 0 : index
    %4 = vector.load %arg3[%c0_2, %c0_3] : memref<8x512xf32, #tpu.memory_space<vmem>>, vector<8x512xf32>
    %5 = math.absf %3 : vector<8x512xf32>
    %cst = arith.constant 0.000000e+00 : f32
    %6 = vector.broadcast %cst : f32 to vector<8x512xf32>
    %7 = arith.subf %6, %5 : vector<8x512xf32>
    %8 = math.exp %7 : vector<8x512xf32>
    %cst_4 = arith.constant 1.000000e+00 : f32
    %9 = vector.broadcast %cst_4 : f32 to vector<8x512xf32>
    %10 = arith.addf %9, %8 : vector<8x512xf32>
    %11 = tpu.reciprocal %10 {approx = true} : vector<8x512xf32> -> vector<8x512xf32>
    %cst_5 = arith.constant 0.000000e+00 : f32
    %12 = vector.broadcast %cst_5 : f32 to vector<8x512xf32>
    %13 = arith.cmpf oge, %3, %12 : vector<8x512xf32>
    %cst_6 = arith.constant 1.000000e+00 : f32
    %14 = vector.broadcast %cst_6 : f32 to vector<8x512xf32>
    %15 = arith.select %13, %14, %8 : vector<8x512xi1>, vector<8x512xf32>
    %16 = arith.mulf %15, %11 : vector<8x512xf32>
    %cst_7 = arith.constant 2.000000e+00 : f32
    %17 = vector.broadcast %cst_7 : f32 to vector<8x512xf32>
    %18 = arith.mulf %17, %4 : vector<8x512xf32>
    %cst_8 = arith.constant 1.000000e+00 : f32
    %19 = vector.broadcast %cst_8 : f32 to vector<8x512xf32>
    %20 = arith.subf %19, %18 : vector<8x512xf32>
    %21 = arith.mulf %16, %20 : vector<8x512xf32>
    %22 = arith.addf %4, %21 : vector<8x512xf32>
    %23 = arith.mulf %22, %22 : vector<8x512xf32>
    %cst_9 = arith.constant -5.000000e-01 : f32
    %24 = vector.broadcast %cst_9 : f32 to vector<8x512xf32>
    %25 = arith.mulf %24, %4 : vector<8x512xf32>
    %cst_10 = arith.constant 7.500000e-01 : f32
    %26 = vector.broadcast %cst_10 : f32 to vector<8x512xf32>
    %27 = arith.addf %26, %25 : vector<8x512xf32>
    %28 = arith.mulf %27, %23 : vector<8x512xf32>
    %cst_11 = arith.constant 0.000000e+00 : f32
    %29 = vector.broadcast %cst_11 : f32 to vector<8x512xf32>
    %30 = arith.maximumf %3, %29 : vector<8x512xf32>
    %31 = arith.mulf %3, %4 : vector<8x512xf32>
    %32 = arith.subf %30, %31 : vector<8x512xf32>
    %33 = math.log1p %8 : vector<8x512xf32>
    %34 = arith.addf %32, %33 : vector<8x512xf32>
    %35 = arith.mulf %34, %28 : vector<8x512xf32>
    %c1_i32 = arith.constant 1 : i32
    %36 = arith.muli %arg0, %c1_i32 : i32
    %37 = arith.addi %36, %arg1 : i32
    %c8_i32 = arith.constant 8 : i32
    %38 = arith.muli %37, %c8_i32 : i32
    %c8_i32_12 = arith.constant 8 : i32
    %39 = arith.subi %c8_i32_12, %38 : i32
    %40 = tpu.iota {dimensions = array<i32: 0>} : vector<8x512xi32>
    %41 = vector.broadcast %39 : i32 to vector<8x512xi32>
    %42 = arith.cmpi slt, %40, %41 : vector<8x512xi32>
    %cst_13 = arith.constant 0.000000e+00 : f32
    %43 = vector.broadcast %cst_13 : f32 to vector<8x512xf32>
    %44 = arith.select %42, %35, %43 : vector<8x512xi1>, vector<8x512xf32>
    %c0_14 = arith.constant 0 : index
    %c0_15 = arith.constant 0 : index
    %45 = vector.load %arg5[%c0_14, %c0_15] : memref<8x512xf32, #tpu.memory_space<vmem>>, vector<8x512xf32>
    %46 = arith.addf %45, %44 : vector<8x512xf32>
    %c0_16 = arith.constant 0 : index
    %c0_17 = arith.constant 0 : index
    %47 = vector.load %arg5[%c0_16, %c0_17] : memref<8x512xf32, #tpu.memory_space<vmem>>, vector<8x512xf32>
    tpu.vector_store %arg5[%c0_16, %c0_17], %46 {strides = array<i32>} : memref<8x512xf32, #tpu.memory_space<vmem>>, vector<8x512xf32>,
    %c0_i32_18 = arith.constant 0 : i32
    %48 = arith.cmpi eq, %arg1, %c0_i32_18 : i32
    %49 = arith.extui %48 : i1 to i32
    %c0_i32_19 = arith.constant 0 : i32
    %50 = arith.cmpi ne, %49, %c0_i32_19 : i32
    scf.if %50 {
      %c0_20 = arith.constant 0 : index
      %c0_21 = arith.constant 0 : index
      %51 = vector.load %arg5[%c0_20, %c0_21] : memref<8x512xf32, #tpu.memory_space<vmem>>, vector<8x512xf32>
      %c0_22 = arith.constant 0 : index
      %c0_23 = arith.constant 0 : index
      %c0_24 = arith.constant 0 : index
      %52 = vector.load %arg4[%c0_22, %c0_23, %c0_24] : memref<1x8x512xf32, #tpu.memory_space<vmem>>, vector<1x8x512xf32>
      %53 = vector.shape_cast %52 : vector<1x8x512xf32> to vector<8x512xf32>
      %54 = vector.shape_cast %51 : vector<8x512xf32> to vector<1x8x512xf32>
      tpu.vector_store %arg4[%c0_22, %c0_23, %c0_24], %54 {strides = array<i32>} : memref<1x8x512xf32, #tpu.memory_space<vmem>>, vector<1x8x512xf32>,
    } else {
    }
    return
  }
  func.func @transform_0(%arg0: i32, %arg1: i32) -> (i32, i32) {
    %c1_i32 = arith.constant 1 : i32
    %0 = arith.muli %arg0, %c1_i32 : i32
    %1 = arith.addi %0, %arg1 : i32
    %c0_i32 = arith.constant 0 : i32
    %2 = arith.minsi %1, %c0_i32 : i32
    %c0_i32_0 = arith.constant 0 : i32
    %c0_i32_1 = arith.constant 0 : i32
    return %2, %c0_i32_0 : i32, i32
  }
  func.func @transform_1(%arg0: i32, %arg1: i32) -> (i32, i32) {
    %c1_i32 = arith.constant 1 : i32
    %0 = arith.muli %arg0, %c1_i32 : i32
    %1 = arith.addi %0, %arg1 : i32
    %c0_i32 = arith.constant 0 : i32
    %2 = arith.minsi %1, %c0_i32 : i32
    %c0_i32_0 = arith.constant 0 : i32
    %c0_i32_1 = arith.constant 0 : i32
    return %2, %c0_i32_0 : i32, i32
  }
  func.func @transform_2(%arg0: i32, %arg1: i32) -> (i32, i32, i32) {
    %c0_i32 = arith.constant 0 : i32
    %c0_i32_0 = arith.constant 0 : i32
    %c0_i32_1 = arith.constant 0 : i32
    return %arg0, %c0_i32, %c0_i32_0 : i32, i32, i32
  }
}

</mosaic_0001>

<llo_original>
// kernel: tpu_custom_call.1
$region0: #{tpu_custom_call.1}
  #allocation0 [shape = 'u32[]', space=smem, size = 0x4, offset = 0x4, fixed_abs, tag = 'smem constant byte address 0x4 - core index']
  #allocation1 [shape = 'u32[144,128]{1,0:T(1,128)}', space=vmem, size = 0x12000, scoped, tag = 'internal scratch']
  #allocation2 [shape = 'f32[8,512]{1,0:T(8,128)}', space=vmem, size = 0x4000, scoped, tag = 'scratch operand']
  %s0 = inlined_call_operand.hbm [shape: f32[8,512], index: 0, kind: input, shape index: {}]
  %s1 = inlined_call_operand.hbm [shape: f32[8,512], index: 1, kind: input, shape index: {}]
  %s2 = inlined_call_operand.hbm [shape: f32[2,8,512], index: 2, kind: output, shape index: {}]
  %s3 = sld [smem:[#allocation0]]
  $region57: #{tpu_custom_call.1} parent=0
    _
  %s5 = ssub.s32 1, %s3
  %s6 = scalar_select 0, %s5, %s3
  $region1: #{tpu_custom_call.1} parent=0
    #allocation3 [shape = 'u8[32768]{0}', space=vmem, size = 0x8000, scoped, tag = 'input window, operand 0']
    #allocation4 [shape = 's32[2]{0}', space=sflag, size = 0x8, scoped, tag = 'scoped memory for tpu_custom_call.1']
    #allocation5 [shape = 's32[2]{0}', space=sflag, size = 0x8, scoped, tag = 'scoped memory for tpu_custom_call.1']
    #allocation6 [shape = 'u8[32768]{0}', space=vmem, size = 0x8000, scoped, tag = 'input window, operand 1']
    #allocation7 [shape = 's32[2]{0}', space=sflag, size = 0x8, scoped, tag = 'scoped memory for tpu_custom_call.1']
    #allocation8 [shape = 'u8[32768]{0}', space=vmem, size = 0x8000, scoped, tag = 'output window, operand 0']
    %7 = vsyncpa [#allocation4], 0
    %s8 = scalar_lea.sflag [#allocation4], 1
    %9 = vsyncpa %s8, 0
    %10 = vsyncpa [#allocation7], 0
    %s11 = scalar_lea.sflag [#allocation7], 1
    %12 = vsyncpa %s11, 0
    %13 = vsyncpa [#allocation5], 0
    %s14 = scalar_lea.sflag [#allocation5], 1
    %15 = vsyncpa %s14, 0
    loop: start=0, step=1, limit=4
    $region2: #{tpu_custom_call.1} parent=1 // loop_pre_header
      _
    $region3: #{tpu_custom_call.1} parent=1 // loop_header
      %s17 = sphi 0, %s21
      %p18 = scmp.ge.s32.totalorder %s17, 4
      %s24 = sphi 0, %s36
      %s25 = sphi 0, %s32
      %s26 = sphi 0, %s24
      %s27 = sphi 0, %s25
      %s28 = sphi 0, %s26
      %s29 = sphi 0, %s27
      %s45 = sphi 0, %s47
      %s48 = sphi 0, %s45
      %s49 = sphi 0, %s48
      %s65 = sphi 0, %s49
      %s77 = sphi 0, %s79
      %s80 = sphi 0, %s77
      %s81 = sphi 0, %s80
      %s97 = sphi 0, %s81
      %s103 = sphi 0, %s105
      %s106 = sphi 0, %s103
      %s107 = sphi 0, %s106
      %s123 = sphi 0, %s107
    $region4: #{tpu_custom_call.1} parent=1 // loop_header_branch
      %20 = sbr.rel (%p18) target = $region8
    $region5: #{tpu_custom_call.1} parent=1 // loop_body
      %s22 = ssub.s32 %s17, 1
      %s23 = ssub.s32 %s17, 2
      %s30 = sadd.s32 1, %s25
      %p31 = scmp.ge.s32.totalorder %s30, 1
      %s32 = scalar_select %p31, 0, %s30
      %s33 = sadd.s32 1, %s24
      %s34 = scalar_select %p31, %s33, %s24
      %p35 = scmp.ge.s32.totalorder %s34, 2
      %s36 = scalar_select %p35, 0, %s34
      %s37 = sadd.s32 %s24, %s25
      %p38 = scmp.lt.s32.totalorder %s37, 0
      %s39 = scalar_select %p38, %s37, 0
      %s40 = sadd.s32 %s36, %s32
      %p41 = scmp.lt.s32.totalorder %s40, 0
      %s42 = scalar_select %p41, %s40, 0
      %s43 = ssub.s32 %s39, %s42
      %p44 = scmp.eq.s32.totalorder %s43, 0
      %s46 = sadd.s32 %s45, 1
      %s47 = scalar_select %p44, %s45, %s46
      %p50 = pneg %p44
      %p51 = scmp.eq.s32.totalorder %s17, 1
      %p52 = por %p50, %p51
      %p53 = scmp.ne.s32.totalorder %s45, %s48
      %p54 = scmp.eq.s32.totalorder %s17, 0
      %p55 = por %p53, %p54
      %p56 = scmp.ne.s32.totalorder %s45, %s48
      %p57 = scmp.eq.s32.totalorder %s22, 1
      %p58 = por %p56, %p57
      %p59 = scmp.ne.s32.totalorder %s48, %s49
      %p60 = scmp.eq.s32.totalorder %s22, 0
      %p61 = por %p59, %p60
      %p62 = scmp.ne.s32.totalorder %s48, %s49
      %p63 = scmp.eq.s32.totalorder %s23, 1
      %p64 = por %p62, %p63
      %p66 = scmp.ne.s32.totalorder %s49, %s65
      %p67 = scmp.eq.s32.totalorder %s23, 0
      %p68 = por %p66, %p67
      %s69 = sadd.s32 %s24, %s25
      %p70 = scmp.lt.s32.totalorder %s69, 0
      %s71 = scalar_select %p70, %s69, 0
      %s72 = sadd.s32 %s36, %s32
      %p73 = scmp.lt.s32.totalorder %s72, 0
      %s74 = scalar_select %p73, %s72, 0
      %s75 = ssub.s32 %s71, %s74
      %p76 = scmp.eq.s32.totalorder %s75, 0
      %s78 = sadd.s32 %s77, 1
      %s79 = scalar_select %p76, %s77, %s78
      %p82 = pneg %p76
      %p83 = scmp.eq.s32.totalorder %s17, 1
      %p84 = por %p82, %p83
      %p85 = scmp.ne.s32.totalorder %s77, %s80
      %p86 = scmp.eq.s32.totalorder %s17, 0
      %p87 = por %p85, %p86
      %p88 = scmp.ne.s32.totalorder %s77, %s80
      %p89 = scmp.eq.s32.totalorder %s22, 1
      %p90 = por %p88, %p89
      %p91 = scmp.ne.s32.totalorder %s80, %s81
      %p92 = scmp.eq.s32.totalorder %s22, 0
      %p93 = por %p91, %p92
      %p94 = scmp.ne.s32.totalorder %s80, %s81
      %p95 = scmp.eq.s32.totalorder %s23, 1
      %p96 = por %p94, %p95
      %p98 = scmp.ne.s32.totalorder %s81, %s97
      %p99 = scmp.eq.s32.totalorder %s23, 0
      %p100 = por %p98, %p99
      %s101 = ssub.s32 %s24, %s36
      %p102 = scmp.eq.s32.totalorder %s101, 0
      %s104 = sadd.s32 %s103, 1
      %s105 = scalar_select %p102, %s103, %s104
      %p108 = pneg %p102
      %p109 = scmp.eq.s32.totalorder %s17, 1
      %p110 = por %p108, %p109
      %p111 = scmp.ne.s32.totalorder %s103, %s106
      %p112 = scmp.eq.s32.totalorder %s17, 0
      %p113 = por %p111, %p112
      %p114 = scmp.ne.s32.totalorder %s103, %s106
      %p115 = scmp.eq.s32.totalorder %s22, 1
      %p116 = por %p114, %p115
      %p117 = scmp.ne.s32.totalorder %s106, %s107
      %p118 = scmp.eq.s32.totalorder %s22, 0
      %p119 = por %p117, %p118
      %p120 = scmp.ne.s32.totalorder %s106, %s107
      %p121 = scmp.eq.s32.totalorder %s23, 1
      %p122 = por %p120, %p121
      %p124 = scmp.ne.s32.totalorder %s107, %s123
      %p125 = scmp.eq.s32.totalorder %s23, 0
      %p126 = por %p124, %p125
      %p127 = scmp.le.s32.totalorder 1, %s17
      %p128 = scmp.lt.s32.totalorder %s17, 3
      %p129 = pnand %p127, %p128
      %p130 = pneg %p129
      // Predicated region
      $region9: #{tpu_custom_call.1} parent=5 // pred_check
        _
      $region10: #{tpu_custom_call.1} parent=5 // pred_check_branch
        %132 = sbr.rel (%p129) target = $region12
      $region11: #{tpu_custom_call.1} parent=5 // pred_region
        %s133 = ssub.s32 %s17, 1
      $region12: #{tpu_custom_call.1} parent=5 // pred_fallthru
        _
      %p134 = scmp.lt.s32.totalorder %s17, 2
      // Predicated region
      $region13: #{tpu_custom_call.1} parent=5 // pred_check
        %p135 = pneg %p134
      $region14: #{tpu_custom_call.1} parent=5 // pred_check_branch
        %137 = sbr.rel (%p135) target = $region16
      $region15: #{tpu_custom_call.1} parent=5 // pred_region
        // Predicated region
        $region17: #{tpu_custom_call.1} parent=15 // pred_check
          %p138 = pneg %p55
        $region18: #{tpu_custom_call.1} parent=15 // pred_check_branch
          %140 = sbr.rel (%p138) target = $region20
        $region19: #{tpu_custom_call.1} parent=15 // pred_region
          %s141 = sand.u32 %s45, 1
          %s142 = scalar_lea.sflag [#allocation4], %s141
          %s143 = sand.u32 %s45, 1
          %s144 = smul.addr %s143, 32
          %s145 = scalar_lea.vmem [#allocation3], %s144
          %s146 = sadd.s32 %s24, %s25
          %p147 = scmp.lt.s32.totalorder %s146, 0
          %s148 = scalar_select %p147, %s146, 0
          %s150 = ssub.s32 512, 512
          %151 = vsyncadd %s142, %s150
          %s152 = smul.addr %s148, 4
          %s153 = smul.addr %s152, 128
          %s154 = scalar_lea.hbm %s0, %s153
          %s156 = sshll.u32 %s145, 4
          %s157 = int_to_ptr.vmem [resolvable:$true] %s156
          %159 = dma.hbm_to_vmem [thread:$0]  %s154, 512, %s157, %s142
        $region20: #{tpu_custom_call.1} parent=15 // pred_fallthru
          _
        // Predicated region
        $region21: #{tpu_custom_call.1} parent=15 // pred_check
          %p160 = pneg %p87
        $region22: #{tpu_custom_call.1} parent=15 // pred_check_branch
          %162 = sbr.rel (%p160) target = $region24
        $region23: #{tpu_custom_call.1} parent=15 // pred_region
          %s163 = sand.u32 %s77, 1
          %s164 = scalar_lea.sflag [#allocation7], %s163
          %s165 = sand.u32 %s77, 1
          %s166 = smul.addr %s165, 32
          %s167 = scalar_lea.vmem [#allocation6], %s166
          %s168 = sadd.s32 %s24, %s25
          %p169 = scmp.lt.s32.totalorder %s168, 0
          %s170 = scalar_select %p169, %s168, 0
          %s172 = ssub.s32 512, 512
          %173 = vsyncadd %s164, %s172
          %s174 = smul.addr %s170, 4
          %s175 = smul.addr %s174, 128
          %s176 = scalar_lea.hbm %s1, %s175
          %s178 = sshll.u32 %s167, 4
          %s179 = int_to_ptr.vmem [resolvable:$true] %s178
          %181 = dma.hbm_to_vmem [thread:$0]  %s176, 512, %s179, %s164
        $region24: #{tpu_custom_call.1} parent=15 // pred_fallthru
          _
      $region16: #{tpu_custom_call.1} parent=5 // pred_fallthru
        _
      %p182 = scmp.le.s32.totalorder 1, %s17
      %p183 = scmp.lt.s32.totalorder %s17, 3
      %p184 = pnand %p182, %p183
      %p185 = pneg %p184
      // Predicated region
      $region25: #{tpu_custom_call.1} parent=5 // pred_check
        _
      $region26: #{tpu_custom_call.1} parent=5 // pred_check_branch
        %187 = sbr.rel (%p184) target = $region28
      $region27: #{tpu_custom_call.1} parent=5 // pred_region
        %s188 = ssub.s32 %s17, 1
        %s189 = sand.u32 %s48, 1
        %s190 = scalar_lea.sflag [#allocation4], %s189
        %s191 = sand.u32 %s48, 1
        %s192 = smul.addr %s191, 32
        %s193 = scalar_lea.vmem [#allocation3], %s192
        // Predicated region
        $region29: #{tpu_custom_call.1} parent=27 // pred_check
          %p194 = pneg %p61
        $region30: #{tpu_custom_call.1} parent=27 // pred_check_branch
          %196 = sbr.rel (%p194) target = $region32
        $region31: #{tpu_custom_call.1} parent=27 // pred_region
          %197 = dma.done %s190, 512
        $region32: #{tpu_custom_call.1} parent=27 // pred_fallthru
          _
        %s198 = sand.u32 %s80, 1
        %s199 = scalar_lea.sflag [#allocation7], %s198
        %s200 = sand.u32 %s80, 1
        %s201 = smul.addr %s200, 32
        %s202 = scalar_lea.vmem [#allocation6], %s201
        // Predicated region
        $region33: #{tpu_custom_call.1} parent=27 // pred_check
          %p203 = pneg %p93
        $region34: #{tpu_custom_call.1} parent=27 // pred_check_branch
          %205 = sbr.rel (%p203) target = $region36
        $region35: #{tpu_custom_call.1} parent=27 // pred_region
          %206 = dma.done %s199, 512
        $region36: #{tpu_custom_call.1} parent=27 // pred_fallthru
          _
        %s207 = sand.u32 %s48, 1
        %s208 = scalar_lea.sflag [#allocation4], %s207
        %s209 = sand.u32 %s48, 1
        %s210 = smul.addr %s209, 32
        %s211 = scalar_lea.vmem [#allocation3], %s210
        %p212 = pneg %p61
        %p213 = pneg %p58
        %s214 = sand.u32 %s80, 1
        %s215 = scalar_lea.sflag [#allocation7], %s214
        %s216 = sand.u32 %s80, 1
        %s217 = smul.addr %s216, 32
        %s218 = scalar_lea.vmem [#allocation6], %s217
        %p219 = pneg %p93
        %p220 = pneg %p90
        %p221 = pneg %p119
        %p222 = pneg %p116
        %s223 = sand.u32 %s106, 1
        %s224 = scalar_lea.sflag [#allocation5], %s223
        %s225 = sand.u32 %s106, 1
        %s226 = smul.addr %s225, 32
        %s227 = scalar_lea.vmem [#allocation8], %s226
        %s228 = sadd.s32 %s26, %s27
        %p229 = scmp.lt.s32.totalorder %s228, 0
        %s230 = scalar_select %p229, %s228, 0
        %s231 = sadd.s32 %s26, %s27
        %p232 = scmp.lt.s32.totalorder %s231, 0
        %s233 = scalar_select %p232, %s231, 0
        %p234 = scmp.eq.s32.totalorder %s27, 0
        // Predicated region
        $region37: #{tpu_custom_call.1} parent=27 // pred_check
          %p235 = pneg %p234
        $region38: #{tpu_custom_call.1} parent=27 // pred_check_branch
          %237 = sbr.rel (%p235) target = $region40
        $region39: #{tpu_custom_call.1} parent=27 // pred_region
          %238 = vst [vmem:[#allocation2] sm:$0xff] 0.0
          %239 = vst [vmem:[#allocation2 + $0x8] sm:$0xff] 0.0
          %240 = vst [vmem:[#allocation2 + $0x10] sm:$0xff] 0.0
          %241 = vst [vmem:[#allocation2 + $0x18] sm:$0xff] 0.0
        $region40: #{tpu_custom_call.1} parent=27 // pred_fallthru
          _
        %v242 = vld [vmem:[%s193] sm:$0xff]
        %v243 = vld [vmem:[%s193 + $0x8] sm:$0xff]
        %v244 = vld [vmem:[%s193 + $0x10] sm:$0xff]
        %v245 = vld [vmem:[%s193 + $0x18] sm:$0xff]
        %v246 = vld [vmem:[%s202] sm:$0xff]
        %v247 = vld [vmem:[%s202 + $0x8] sm:$0xff]
        %v248 = vld [vmem:[%s202 + $0x10] sm:$0xff]
        %v249 = vld [vmem:[%s202 + $0x18] sm:$0xff]
        %v250 = vand.u32 2147483647, %v242
        %v251 = vand.u32 2147483647, %v243
        %v252 = vand.u32 2147483647, %v244
        %v253 = vand.u32 2147483647, %v245
        %v254 = vsub.f32 0.0, %v250
        %v255 = vsub.f32 0.0, %v251
        %v256 = vsub.f32 0.0, %v252
        %v257 = vsub.f32 0.0, %v253
        %v258 = vmul.f32 %v254, 1.442695
        %v259 = vpow.pop %v258
        %v260 = vmul.f32 %v255, 1.442695
        %v261 = vpow.pop %v260
        %v262 = vmul.f32 %v256, 1.442695
        %v263 = vpow.pop %v262
        %v264 = vmul.f32 %v257, 1.442695
        %v265 = vpow.pop %v264
        %v266 = vadd.f32 %v259, 1.0
        %v267 = vadd.f32 %v261, 1.0
        %v268 = vadd.f32 %v263, 1.0
        %v269 = vadd.f32 %v265, 1.0
        %v270 = vrcp.pop %v266
        %v271 = vrcp.pop %v267
        %v272 = vrcp.pop %v268
        %v273 = vrcp.pop %v269
        %vm274 = vcmp.ge.f32.partialorder %v242, 0.0
        %vm275 = vcmp.ge.f32.partialorder %v243, 0.0
        %vm276 = vcmp.ge.f32.partialorder %v244, 0.0
        %vm277 = vcmp.ge.f32.partialorder %v245, 0.0
        %v278 = vsel %vm274, 1.0, %v259
        %v279 = vsel %vm275, 1.0, %v261
        %v280 = vsel %vm276, 1.0, %v263
        %v281 = vsel %vm277, 1.0, %v265
        %v282 = vmul.f32 %v278, %v270
        %v283 = vmul.f32 %v279, %v271
        %v284 = vmul.f32 %v280, %v272
        %v285 = vmul.f32 %v281, %v273
        %v286 = vmul.f32 %v246, 2.0
        %v287 = vmul.f32 %v247, 2.0
        %v288 = vmul.f32 %v248, 2.0
        %v289 = vmul.f32 %v249, 2.0
        %v290 = vsub.f32 1.0, %v286
        %v291 = vsub.f32 1.0, %v287
        %v292 = vsub.f32 1.0, %v288
        %v293 = vsub.f32 1.0, %v289
        %v294 = vmul.f32 %v282, %v290
        %v295 = vmul.f32 %v283, %v291
        %v296 = vmul.f32 %v284, %v292
        %v297 = vmul.f32 %v285, %v293
        %v298 = vadd.f32 %v246, %v294
        %v299 = vadd.f32 %v247, %v295
        %v300 = vadd.f32 %v248, %v296
        %v301 = vadd.f32 %v249, %v297
        %v302 = vmul.f32 %v298, %v298
        %v303 = vmul.f32 %v299, %v299
        %v304 = vmul.f32 %v300, %v300
        %v305 = vmul.f32 %v301, %v301
        %v306 = vmul.f32 %v246, -0.5
        %v307 = vmul.f32 %v247, -0.5
        %v308 = vmul.f32 %v248, -0.5
        %v309 = vmul.f32 %v249, -0.5
        %v310 = vadd.f32 %v306, 0.75
        %v311 = vadd.f32 %v307, 0.75
        %v312 = vadd.f32 %v308, 0.75
        %v313 = vadd.f32 %v309, 0.75
        %v314 = vmul.f32 %v310, %v302
        %v315 = vmul.f32 %v311, %v303
        %v316 = vmul.f32 %v312, %v304
        %v317 = vmul.f32 %v313, %v305
        %v318 = vmax.f32 %v242, 0.0
        %v319 = vmax.f32 %v243, 0.0
        %v320 = vmax.f32 %v244, 0.0
        %v321 = vmax.f32 %v245, 0.0
        %v322 = vmul.f32 %v242, %v246
        %v323 = vmul.f32 %v243, %v247
        %v324 = vmul.f32 %v244, %v248
        %v325 = vmul.f32 %v245, %v249
        %v326 = vsub.f32 %v318, %v322
        %v327 = vsub.f32 %v319, %v323
        %v328 = vsub.f32 %v320, %v324
        %v329 = vsub.f32 %v321, %v325
        %v330 = vadd.f32 %v259, 1.0
        %v331 = vlog2.pop %v330
        %v332 = vmul.f32 %v331, 0.6931472
        %v333 = vmul.f32 -0.5, %v259
        %v334 = vadd.f32 %v333, 1.0
        %v335 = vmul.f32 %v334, %v259
        %v336 = vand.u32 2147483647, %v259
        %vm337 = vcmp.lt.f32.partialorder %v336, 0.0004427343
        %v338 = vsel %vm337, %v335, %v332
        %v339 = vadd.f32 %v261, 1.0
        %v340 = vlog2.pop %v339
        %v341 = vmul.f32 %v340, 0.6931472
        %v342 = vmul.f32 -0.5, %v261
        %v343 = vadd.f32 %v342, 1.0
        %v344 = vmul.f32 %v343, %v261
        %v345 = vand.u32 2147483647, %v261
        %vm346 = vcmp.lt.f32.partialorder %v345, 0.0004427343
        %v347 = vsel %vm346, %v344, %v341
        %v348 = vadd.f32 %v263, 1.0
        %v349 = vlog2.pop %v348
        %v350 = vmul.f32 %v349, 0.6931472
        %v351 = vmul.f32 -0.5, %v263
        %v352 = vadd.f32 %v351, 1.0
        %v353 = vmul.f32 %v352, %v263
        %v354 = vand.u32 2147483647, %v263
        %vm355 = vcmp.lt.f32.partialorder %v354, 0.0004427343
        %v356 = vsel %vm355, %v353, %v350
        %v357 = vadd.f32 %v265, 1.0
        %v358 = vlog2.pop %v357
        %v359 = vmul.f32 %v358, 0.6931472
        %v360 = vmul.f32 -0.5, %v265
        %v361 = vadd.f32 %v360, 1.0
        %v362 = vmul.f32 %v361, %v265
        %v363 = vand.u32 2147483647, %v265
        %vm364 = vcmp.lt.f32.partialorder %v363, 0.0004427343
        %v365 = vsel %vm364, %v362, %v359
        %v366 = vadd.f32 %v326, %v338
        %v367 = vadd.f32 %v327, %v347
        %v368 = vadd.f32 %v328, %v356
        %v369 = vadd.f32 %v329, %v365
        %v370 = vmul.f32 %v366, %v314
        %v371 = vmul.f32 %v367, %v315
        %v372 = vmul.f32 %v368, %v316
        %v373 = vmul.f32 %v369, %v317
        %s374 = sadd.s32 %s26, %s27
        %s375 = smul.u32 %s374, 8
        %s376 = ssub.s32 8, %s375
        %v377 = vlaneseq
        %v378 = vshrl.u32 %v377, 7
        %v379 = vstv %s376
        %vm380 = vcmp.lt.s32.totalorder %v378, %v379
        %v381 = vsel %vm380, %v370, 0.0
        %v382 = vsel %vm380, %v371, 0.0
        %v383 = vsel %vm380, %v372, 0.0
        %v384 = vsel %vm380, %v373, 0.0
        %v385 = vld [vmem:[#allocation2] sm:$0xff]
        %v386 = vld [vmem:[#allocation2 + $0x8] sm:$0xff]
        %v387 = vld [vmem:[#allocation2 + $0x10] sm:$0xff]
        %v388 = vld [vmem:[#allocation2 + $0x18] sm:$0xff]
        %v389 = vadd.f32 %v385, %v381
        %v390 = vadd.f32 %v386, %v382
        %v391 = vadd.f32 %v387, %v383
        %v392 = vadd.f32 %v388, %v384
        %393 = vst [vmem:[#allocation2] sm:$0xff] %v389
        %394 = vst [vmem:[#allocation2 + $0x8] sm:$0xff] %v390
        %395 = vst [vmem:[#allocation2 + $0x10] sm:$0xff] %v391
        %396 = vst [vmem:[#allocation2 + $0x18] sm:$0xff] %v392
        // Predicated region
        $region41: #{tpu_custom_call.1} parent=27 // pred_check
          %p397 = pneg %p234
        $region42: #{tpu_custom_call.1} parent=27 // pred_check_branch
          %399 = sbr.rel (%p397) target = $region44
        $region43: #{tpu_custom_call.1} parent=27 // pred_region
          %v400 = vld [vmem:[#allocation2] sm:$0xff]
          %v401 = vld [vmem:[#allocation2 + $0x8] sm:$0xff]
          %v402 = vld [vmem:[#allocation2 + $0x10] sm:$0xff]
          %v403 = vld [vmem:[#allocation2 + $0x18] sm:$0xff]
          %404 = vst [vmem:[%s227] sm:$0xff] %v400
          %405 = vst [vmem:[%s227 + $0x8] sm:$0xff] %v401
          %406 = vst [vmem:[%s227 + $0x10] sm:$0xff] %v402
          %407 = vst [vmem:[%s227 + $0x18] sm:$0xff] %v403
        $region44: #{tpu_custom_call.1} parent=27 // pred_fallthru
          _
        %s408 = sand.u32 %s106, 1
        %s409 = scalar_lea.sflag [#allocation5], %s408
        %s410 = sand.u32 %s106, 1
        %s411 = smul.addr %s410, 32
        %s412 = scalar_lea.vmem [#allocation8], %s411
        // Predicated region
        $region45: #{tpu_custom_call.1} parent=27 // pred_check
          %p413 = pneg %p116
        $region46: #{tpu_custom_call.1} parent=27 // pred_check_branch
          %415 = sbr.rel (%p413) target = $region48
        $region47: #{tpu_custom_call.1} parent=27 // pred_region
          %s417 = ssub.s32 512, 512
          %418 = vsyncadd %s409, %s417
          %s419 = smul.addr %s26, 4
          %s420 = smul.addr %s419, 128
          %s421 = scalar_lea.hbm %s2, %s420
          %s423 = sshll.u32 %s412, 4
          %s424 = int_to_ptr.vmem [resolvable:$true] %s423
          %426 = dma.vmem_to_hbm [thread:$0]  %s424, 512, %s421, %s409
        $region48: #{tpu_custom_call.1} parent=27 // pred_fallthru
          _
      $region28: #{tpu_custom_call.1} parent=5 // pred_fallthru
        _
      %p427 = scmp.le.s32.totalorder 2, %s17
      // Predicated region
      $region49: #{tpu_custom_call.1} parent=5 // pred_check
        %p428 = pneg %p427
      $region50: #{tpu_custom_call.1} parent=5 // pred_check_branch
        %430 = sbr.rel (%p428) target = $region52
      $region51: #{tpu_custom_call.1} parent=5 // pred_region
        %s431 = ssub.s32 %s17, 2
        // Predicated region
        $region53: #{tpu_custom_call.1} parent=51 // pred_check
          %p432 = pneg %p122
        $region54: #{tpu_custom_call.1} parent=51 // pred_check_branch
          %434 = sbr.rel (%p432) target = $region56
        $region55: #{tpu_custom_call.1} parent=51 // pred_region
          %s435 = sand.u32 %s107, 1
          %s436 = scalar_lea.sflag [#allocation5], %s435
          %s437 = sand.u32 %s107, 1
          %s438 = smul.addr %s437, 32
          %s439 = scalar_lea.vmem [#allocation8], %s438
          %440 = dma.done %s436, 512
        $region56: #{tpu_custom_call.1} parent=51 // pred_fallthru
          _
      $region52: #{tpu_custom_call.1} parent=5 // pred_fallthru
        _
    $region6: #{tpu_custom_call.1} parent=1 // loop_footer
      %s21 = sadd.s32 1, %s17
    $region7: #{tpu_custom_call.1} parent=1 // loop_footer_branch
      %16 = sbr.rel target = $region3
    $region8: #{tpu_custom_call.1} parent=1 // loop_exit
      _
    %441 = vsyncpa [#allocation4], 1
    %s442 = scalar_lea.sflag [#allocation4], 1
    %443 = vsyncpa %s442, 1
    %444 = vsyncpa [#allocation7], 1
    %s445 = scalar_lea.sflag [#allocation7], 1
    %446 = vsyncpa %s445, 1
    %447 = vsyncpa [#allocation5], 1
    %s448 = scalar_lea.sflag [#allocation5], 1
    %449 = vsyncpa %s448, 1

</llo_original>
